<compile_context>
chip_gen: v5e
topology: v5e:2x2
jax: 0.10.0
libtpu: 0.0.40
codegen_flags: <defaults>
</compile_context>

<pallas_src>
import jax
import jax.numpy as jnp
from jax.experimental import pallas as pl
from jax.experimental.pallas import tpu as pltpu


def _round_up(x, m):
    return ((x + m - 1) // m) * m


def site_encoder_kernel(idx_ref, table_ref, out_ref):
    # idx_ref:   (1, TILE_N)       int32   lane-dense gather indices
    # table_ref: (S_pad, OUT_pad)  float32 fused emb@W+b table (zero padded)
    # out_ref:   (TILE_N, OUT_pad) float32
    idx = idx_ref[...]                                     # (1, TILE_N)
    s_pad = table_ref.shape[0]
    tile_n = out_ref.shape[0]

    # Transposed one-hot via free sublane broadcast of the lane-dense indices,
    # then one XLU transpose into matmul orientation.
    sites = jax.lax.broadcasted_iota(jnp.int32, (s_pad, tile_n), 0)
    one_hot_t = (sites == idx).astype(jnp.float32)         # (S_pad, TILE_N)
    one_hot = jnp.transpose(one_hot_t)                     # (TILE_N, S_pad)

    # Single MXU matmul == row gather of the fused table (bias already folded).
    h = jnp.dot(one_hot, table_ref[...], preferred_element_type=jnp.float32)
    out_ref[...] = jnp.maximum(h, 0.0)                     # ReLU on the VPU


def site_encoder_forward(indices, emb_table, w, b, *, tile_n=512):
    """indices: int array of any shape; returns float32 (*indices.shape, out_dim)."""
    orig_shape = indices.shape
    idx_flat = indices.reshape(-1).astype(jnp.int32)
    n = idx_flat.shape[0]
    num_sites, _ = emb_table.shape
    out_dim = w.shape[1]

    # Algebraic fusion (plain JAX, once per call):
    #   relu(emb[idx] @ W + b) == relu((emb @ W + b)[idx])
    fused = jnp.dot(emb_table.astype(jnp.float32), w.astype(jnp.float32),
                    preferred_element_type=jnp.float32) + b.reshape(1, out_dim)

    # Pad contraction (sites) and output dims to full MXU / lane tiles.
    s_pad = _round_up(max(num_sites, 128), 128)
    out_pad = _round_up(out_dim, 128)
    fused = jnp.pad(fused, ((0, s_pad - num_sites), (0, out_pad - out_dim)))

    # Tile the batch dim; tile must be a multiple of 128 (lane-dense idx block)
    # which also satisfies the 8-sublane requirement of the output block.
    tile_n = min(tile_n, _round_up(max(n, 1), 128))
    n_pad = _round_up(max(n, 1), tile_n)
    idx_padded = jnp.pad(idx_flat, (0, n_pad - n)).reshape(1, n_pad)  # lane-dense

    grid = (n_pad // tile_n,)
    out = pl.pallas_call(
        site_encoder_kernel,
        out_shape=jax.ShapeDtypeStruct((n_pad, out_pad), jnp.float32),
        grid=grid,
        in_specs=[
            pl.BlockSpec((1, tile_n), lambda i: (0, i)),       # gather indices
            pl.BlockSpec((s_pad, out_pad), lambda i: (0, 0)),  # resident fused table
        ],
        out_specs=pl.BlockSpec((tile_n, out_pad), lambda i: (i, 0)),
        compiler_params=pltpu.CompilerParams(
            dimension_semantics=("parallel",),   # shard N across TCs on v7x
            vmem_limit_bytes=32 << 20,
        ),
    )(idx_padded, fused)

    out = out[:n, :out_dim]
    return out.reshape(*orig_shape, out_dim)


if __name__ == "__main__":
    # Small, deterministic config (matches the torch module's shapes).
    num_sites = 16
    embedding_dim = 32
    out_dim = 512
    batch, seq = 2, 8

    key = jax.random.PRNGKey(0)
    k_idx, k_emb, k_w, k_b = jax.random.split(key, 4)

    # Parameters (nn.Embedding.weight, and transpose of nn.Linear.weight + bias).
    emb_table = jax.random.normal(k_emb, (num_sites, embedding_dim), jnp.float32)
    bound = 1.0 / (embedding_dim ** 0.5)
    w = jax.random.uniform(k_w, (embedding_dim, out_dim), jnp.float32,
                           minval=-bound, maxval=bound)
    b = jax.random.uniform(k_b, (1, out_dim), jnp.float32,
                           minval=-bound, maxval=bound)

    # Input: integer site ids, shape (batch, seq).
    x = jax.random.randint(k_idx, (batch, seq), 0, num_sites, dtype=jnp.int32)

    out = site_encoder_forward(x, emb_table, w, b)
    out = jax.block_until_ready(out)

    # Reference check in plain JAX (same semantics as the torch module).
    ref = jnp.maximum(emb_table[x] @ w + b[0], 0.0)
    assert out.shape == (batch, seq, out_dim)
    assert jnp.allclose(out, ref, atol=1e-5, rtol=1e-5)

    print("KERNEL_OK")
</pallas_src>

<mosaic_0001>
module attributes {stable_mosaic.version = 11 : i64} {
  func.func @site_encoder_kernel(%arg0: i32, %arg1: memref<1x128xi32, #tpu.memory_space<vmem>>, %arg2: memref<128x512xf32, #tpu.memory_space<vmem>>, %arg3: memref<128x512xf32, #tpu.memory_space<vmem>>) attributes {dimension_semantics = [#tpu.dimension_semantics<parallel>], iteration_bounds = array<i64: 1>, scalar_prefetch = 0 : i64, scratch_operands = 0 : i64, tpu.core_type = #tpu.core_type<tc>, window_params = [{transform_indices = @transform_0, window_bounds = array<i64: 1, 128>}, {pipeline_mode = #tpu.pipeline_mode<synchronous>, transform_indices = @transform_1, window_bounds = array<i64: 128, 512>}, {transform_indices = @transform_2, window_bounds = array<i64: 128, 512>}]} {
    %c0 = arith.constant 0 : index
    %c0_0 = arith.constant 0 : index
    %0 = vector.load %arg1[%c0, %c0_0] : memref<1x128xi32, #tpu.memory_space<vmem>>, vector<1x128xi32>
    %1 = tpu.iota {dimensions = array<i32: 0>} : vector<128x128xi32>
    %2 = vector.broadcast %0 : vector<1x128xi32> to vector<128x128xi32>
    %3 = arith.cmpi eq, %1, %2 : vector<128x128xi32>
    %4 = arith.extui %3 : vector<128x128xi1> to vector<128x128xi32>
    %5 = arith.sitofp %4 : vector<128x128xi32> to vector<128x128xf32>
    %6 = tpu.transpose %5, [1, 0] : vector<128x128xf32> -> vector<128x128xf32>
    %c0_1 = arith.constant 0 : index
    %c0_2 = arith.constant 0 : index
    %7 = vector.load %arg2[%c0_1, %c0_2] : memref<128x512xf32, #tpu.memory_space<vmem>>, vector<128x512xf32>
    %cst = arith.constant dense<0.000000e+00> : vector<128x512xf32>
    %8 = tpu.matmul %6, %7, %cst {dimension_numbers = #tpu.dot_dimension_numbers<[1], [0], [0], [1], [0, 0, 1, 1], [], []>} : vector<128x128xf32>, vector<128x512xf32>, vector<128x512xf32> -> vector<128x512xf32>
    %cst_3 = arith.constant 0.000000e+00 : f32
    %9 = vector.broadcast %cst_3 : f32 to vector<128x512xf32>
    %10 = arith.maximumf %8, %9 : vector<128x512xf32>
    %c0_4 = arith.constant 0 : index
    %c0_5 = arith.constant 0 : index
    %11 = vector.load %arg3[%c0_4, %c0_5] : memref<128x512xf32, #tpu.memory_space<vmem>>, vector<128x512xf32>
    tpu.vector_store %arg3[%c0_4, %c0_5], %10 {strides = array<i32>} : memref<128x512xf32, #tpu.memory_space<vmem>>, vector<128x512xf32>,
    return
  }
  func.func @transform_0(%arg0: i32) -> (i32, i32) {
    %c0_i32 = arith.constant 0 : i32
    %c0_i32_0 = arith.constant 0 : i32
    return %c0_i32, %arg0 : i32, i32
  }
  func.func @transform_1(%arg0: i32) -> (i32, i32) {
    %c0_i32 = arith.constant 0 : i32
    %c0_i32_0 = arith.constant 0 : i32
    %c0_i32_1 = arith.constant 0 : i32
    return %c0_i32, %c0_i32_0 : i32, i32
  }
  func.func @transform_2(%arg0: i32) -> (i32, i32) {
    %c0_i32 = arith.constant 0 : i32
    %c0_i32_0 = arith.constant 0 : i32
    return %arg0, %c0_i32 : i32, i32
  }
}

</mosaic_0001>

<llo_original>
// kernel: tpu_custom_call.1
$region0: #{tpu_custom_call.1}
  #allocation0 [shape = 'u32[]', space=smem, size = 0x4, offset = 0x4, fixed_abs, tag = 'smem constant byte address 0x4 - core index']
  #allocation1 [shape = 'u32[72,128]{1,0:T(1,128)}', space=vmem, size = 0x9000, scoped, tag = 'internal scratch']
  %s0 = inlined_call_operand.hbm [shape: s32[1,128], index: 0, kind: input, shape index: {}]
  %s1 = inlined_call_operand.hbm [shape: f32[128,512], index: 1, kind: input, shape index: {}]
  %s2 = inlined_call_operand.hbm [shape: f32[128,512], index: 2, kind: output, shape index: {}]
  %s3 = sld [smem:[#allocation0]]
  $region26: #{tpu_custom_call.1} parent=0
    _
  %s5 = ssub.s32 1, %s3
  %s6 = scalar_select 0, %s5, %s3
  $region1: #{tpu_custom_call.1} parent=0
    #allocation2 [shape = 'u8[512]{0}', space=vmem, size = 0x400, scoped, tag = 'input window, operand 0, single buffered']
    #allocation3 [shape = 's32[1]{0}', space=sflag, size = 0x4, scoped, tag = 'scoped memory for tpu_custom_call.1']
    #allocation4 [shape = 's32[1]{0}', space=sflag, size = 0x4, scoped, tag = 'scoped memory for tpu_custom_call.1']
    #allocation5 [shape = 'u8[262144]{0}', space=vmem, size = 0x40000, scoped, tag = 'input window, operand 1, single buffered']
    #allocation6 [shape = 's32[1]{0}', space=sflag, size = 0x4, scoped, tag = 'scoped memory for tpu_custom_call.1']
    #allocation7 [shape = 'u8[262144]{0}', space=vmem, size = 0x40000, scoped, tag = 'output window, operand 0, single buffered']
    %7 = vsyncpa [#allocation3], 0
    %8 = vsyncpa [#allocation6], 0
    %9 = vsyncpa [#allocation4], 0
    // Predicated region
    $region2: #{tpu_custom_call.1} parent=1 // pred_check
      _
    $region3: #{tpu_custom_call.1} parent=1 // pred_check_branch
      %11 = sbr.rel (0) target = $region5
    $region4: #{tpu_custom_call.1} parent=1 // pred_region
      %13 = vsyncadd [#allocation3], 0
      %s15 = sshll.u32 %s0, 4
      %s16 = int_to_ptr.hbm [resolvable:$true] %s15
      %s17 = sshll.u32 [#allocation2], 4
      %s18 = int_to_ptr.vmem [resolvable:$true] %s17
      %20 = dma.hbm_to_vmem [thread:$0]  %s16, 16, %s18, [#allocation3]
    $region5: #{tpu_custom_call.1} parent=1 // pred_fallthru
      _
    // Predicated region
    $region6: #{tpu_custom_call.1} parent=1 // pred_check
      _
    $region7: #{tpu_custom_call.1} parent=1 // pred_check_branch
      %22 = sbr.rel (0) target = $region9
    $region8: #{tpu_custom_call.1} parent=1 // pred_region
      %24 = vsyncadd [#allocation6], 0
      %s25 = sshll.u32 %s1, 4
      %s26 = int_to_ptr.hbm [resolvable:$true] %s25
      %s27 = sshll.u32 [#allocation5], 4
      %s28 = int_to_ptr.vmem [resolvable:$true] %s27
      %33 = dma.hbm_to_vmem [thread:$0]  %s26, 8192, %s28, [#allocation6], 512, 512, 32
    $region9: #{tpu_custom_call.1} parent=1 // pred_fallthru
      _
    // Predicated region
    $region10: #{tpu_custom_call.1} parent=1 // pred_check
      _
    $region11: #{tpu_custom_call.1} parent=1 // pred_check_branch
      %35 = sbr.rel (0) target = $region13
    $region12: #{tpu_custom_call.1} parent=1 // pred_region
      %37 = dma.done [#allocation3], 16
    $region13: #{tpu_custom_call.1} parent=1 // pred_fallthru
      _
    // Predicated region
    $region14: #{tpu_custom_call.1} parent=1 // pred_check
      _
    $region15: #{tpu_custom_call.1} parent=1 // pred_check_branch
      %39 = sbr.rel (0) target = $region17
    $region16: #{tpu_custom_call.1} parent=1 // pred_region
      %41 = dma.done [#allocation6], 8192
    $region17: #{tpu_custom_call.1} parent=1 // pred_fallthru
      _
    %v42 = vld [vmem:[#allocation2] sm:$0x1]
    %v43 = vlaneseq
    %v44 = vshrl.u32 %v43, 7
    %v45 = vadd.s32 %v44, 8
    %v46 = vadd.s32 %v44, 16
    %v47 = vadd.s32 %v44, 24
    %v48 = vadd.s32 %v44, 32
    %v49 = vadd.s32 %v44, 40
    %v50 = vadd.s32 %v44, 48
    %v51 = vadd.s32 %v44, 56
    %v52 = vadd.s32 %v44, 64
    %v53 = vadd.s32 %v44, 72
    %v54 = vadd.s32 %v44, 80
    %v55 = vadd.s32 %v44, 88
    %v56 = vadd.s32 %v44, 96
    %v57 = vadd.s32 %v44, 104
    %v58 = vadd.s32 %v44, 112
    %v59 = vadd.s32 %v44, 120
    %v60 = vperm.slane %v42, 0
    %vm61 = vcmp.eq.s32.totalorder %v44, %v60
    %vm62 = vcmp.eq.s32.totalorder %v45, %v60
    %vm63 = vcmp.eq.s32.totalorder %v46, %v60
    %vm64 = vcmp.eq.s32.totalorder %v47, %v60
    %vm65 = vcmp.eq.s32.totalorder %v48, %v60
    %vm66 = vcmp.eq.s32.totalorder %v49, %v60
    %vm67 = vcmp.eq.s32.totalorder %v50, %v60
    %vm68 = vcmp.eq.s32.totalorder %v51, %v60
    %vm69 = vcmp.eq.s32.totalorder %v52, %v60
    %vm70 = vcmp.eq.s32.totalorder %v53, %v60
    %vm71 = vcmp.eq.s32.totalorder %v54, %v60
    %vm72 = vcmp.eq.s32.totalorder %v55, %v60
    %vm73 = vcmp.eq.s32.totalorder %v56, %v60
    %vm74 = vcmp.eq.s32.totalorder %v57, %v60
    %vm75 = vcmp.eq.s32.totalorder %v58, %v60
    %vm76 = vcmp.eq.s32.totalorder %v59, %v60
    %v77 = vsel %vm61, 1, 0
    %v78 = vsel %vm62, 1, 0
    %v79 = vsel %vm63, 1, 0
    %v80 = vsel %vm64, 1, 0
    %v81 = vsel %vm65, 1, 0
    %v82 = vsel %vm66, 1, 0
    %v83 = vsel %vm67, 1, 0
    %v84 = vsel %vm68, 1, 0
    %v85 = vsel %vm69, 1, 0
    %v86 = vsel %vm70, 1, 0
    %v87 = vsel %vm71, 1, 0
    %v88 = vsel %vm72, 1, 0
    %v89 = vsel %vm73, 1, 0
    %v90 = vsel %vm74, 1, 0
    %v91 = vsel %vm75, 1, 0
    %v92 = vsel %vm76, 1, 0
    %v93 = vcvt.s32.f32 %v77
    %v94 = vcvt.s32.f32 %v78
    %v95 = vcvt.s32.f32 %v79
    %v96 = vcvt.s32.f32 %v80
    %v97 = vcvt.s32.f32 %v81
    %v98 = vcvt.s32.f32 %v82
    %v99 = vcvt.s32.f32 %v83
    %v100 = vcvt.s32.f32 %v84
    %v101 = vcvt.s32.f32 %v85
    %v102 = vcvt.s32.f32 %v86
    %v103 = vcvt.s32.f32 %v87
    %v104 = vcvt.s32.f32 %v88
    %v105 = vcvt.s32.f32 %v89
    %v106 = vcvt.s32.f32 %v90
    %v107 = vcvt.s32.f32 %v91
    %v108 = vcvt.s32.f32 %v92
    %109 = vxpose.xlu0.b32.start [1/16] %v93, 128
    %110 = vxpose.xlu0.b32.cont [2/16] %v94, 128
    %111 = vxpose.xlu0.b32.cont [3/16] %v95, 128
    %112 = vxpose.xlu0.b32.cont [4/16] %v96, 128
    %113 = vxpose.xlu0.b32.cont [5/16] %v97, 128
    %114 = vxpose.xlu0.b32.cont [6/16] %v98, 128
    %115 = vxpose.xlu0.b32.cont [7/16] %v99, 128
    %116 = vxpose.xlu0.b32.cont [8/16] %v100, 128
    %117 = vxpose.xlu0.b32.cont [9/16] %v101, 128
    %118 = vxpose.xlu0.b32.cont [10/16] %v102, 128
    %119 = vxpose.xlu0.b32.cont [11/16] %v103, 128
    %120 = vxpose.xlu0.b32.cont [12/16] %v104, 128
    %121 = vxpose.xlu0.b32.cont [13/16] %v105, 128
    %122 = vxpose.xlu0.b32.cont [14/16] %v106, 128
    %123 = vxpose.xlu0.b32.cont [15/16] %v107, 128
    %124 = vxpose.xlu0.b32.end [16/16] %v108, 128
    %v125 = vpop.trf.xlu0
    %v126 = vpop.trf.xlu0
    %v127 = vpop.trf.xlu0
    %v128 = vpop.trf.xlu0
    %v129 = vpop.trf.xlu0
    %v130 = vpop.trf.xlu0
    %v131 = vpop.trf.xlu0
    %v132 = vpop.trf.xlu0
    %v133 = vpop.trf.xlu0
    %v134 = vpop.trf.xlu0
    %v135 = vpop.trf.xlu0
    %v136 = vpop.trf.xlu0
    %v137 = vpop.trf.xlu0
    %v138 = vpop.trf.xlu0
    %v139 = vpop.trf.xlu0
    %v140 = vpop.trf.xlu0
    %v141 = vld [vmem:[#allocation5] sm:$0xff]
    %v142 = vld [vmem:[#allocation5 + $0x8] sm:$0xff]
    %v143 = vld [vmem:[#allocation5 + $0x10] sm:$0xff]
    %v144 = vld [vmem:[#allocation5 + $0x18] sm:$0xff]
    %v145 = vld [vmem:[#allocation5 + $0x20] sm:$0xff]
    %v146 = vld [vmem:[#allocation5 + $0x28] sm:$0xff]
    %v147 = vld [vmem:[#allocation5 + $0x30] sm:$0xff]
    %v148 = vld [vmem:[#allocation5 + $0x38] sm:$0xff]
    %v149 = vld [vmem:[#allocation5 + $0x40] sm:$0xff]
    %v150 = vld [vmem:[#allocation5 + $0x48] sm:$0xff]
    %v151 = vld [vmem:[#allocation5 + $0x50] sm:$0xff]
    %v152 = vld [vmem:[#allocation5 + $0x58] sm:$0xff]
    %v153 = vld [vmem:[#allocation5 + $0x60] sm:$0xff]
    %v154 = vld [vmem:[#allocation5 + $0x68] sm:$0xff]
    %v155 = vld [vmem:[#allocation5 + $0x70] sm:$0xff]
    %v156 = vld [vmem:[#allocation5 + $0x78] sm:$0xff]
    %v157 = vld [vmem:[#allocation5 + $0x80] sm:$0xff]
    %v158 = vld [vmem:[#allocation5 + $0x88] sm:$0xff]
    %v159 = vld [vmem:[#allocation5 + $0x90] sm:$0xff]
    %v160 = vld [vmem:[#allocation5 + $0x98] sm:$0xff]
    %v161 = vld [vmem:[#allocation5 + $0xa0] sm:$0xff]
    %v162 = vld [vmem:[#allocation5 + $0xa8] sm:$0xff]
    %v163 = vld [vmem:[#allocation5 + $0xb0] sm:$0xff]
    %v164 = vld [vmem:[#allocation5 + $0xb8] sm:$0xff]
    %v165 = vld [vmem:[#allocation5 + $0xc0] sm:$0xff]
    %v166 = vld [vmem:[#allocation5 + $0xc8] sm:$0xff]
    %v167 = vld [vmem:[#allocation5 + $0xd0] sm:$0xff]
    %v168 = vld [vmem:[#allocation5 + $0xd8] sm:$0xff]
    %v169 = vld [vmem:[#allocation5 + $0xe0] sm:$0xff]
    %v170 = vld [vmem:[#allocation5 + $0xe8] sm:$0xff]
    %v171 = vld [vmem:[#allocation5 + $0xf0] sm:$0xff]
    %v172 = vld [vmem:[#allocation5 + $0xf8] sm:$0xff]
    %v173 = vld [vmem:[#allocation5 + $0x100] sm:$0xff]
    %v174 = vld [vmem:[#allocation5 + $0x108] sm:$0xff]
    %v175 = vld [vmem:[#allocation5 + $0x110] sm:$0xff]
    %v176 = vld [vmem:[#allocation5 + $0x118] sm:$0xff]
    %v177 = vld [vmem:[#allocation5 + $0x120] sm:$0xff]
    %v178 = vld [vmem:[#allocation5 + $0x128] sm:$0xff]
    %v179 = vld [vmem:[#allocation5 + $0x130] sm:$0xff]
    %v180 = vld [vmem:[#allocation5 + $0x138] sm:$0xff]
    %v181 = vld [vmem:[#allocation5 + $0x140] sm:$0xff]
    %v182 = vld [vmem:[#allocation5 + $0x148] sm:$0xff]
    %v183 = vld [vmem:[#allocation5 + $0x150] sm:$0xff]
    %v184 = vld [vmem:[#allocation5 + $0x158] sm:$0xff]
    %v185 = vld [vmem:[#allocation5 + $0x160] sm:$0xff]
    %v186 = vld [vmem:[#allocation5 + $0x168] sm:$0xff]
    %v187 = vld [vmem:[#allocation5 + $0x170] sm:$0xff]
    %v188 = vld [vmem:[#allocation5 + $0x178] sm:$0xff]
    %v189 = vld [vmem:[#allocation5 + $0x180] sm:$0xff]
    %v190 = vld [vmem:[#allocation5 + $0x188] sm:$0xff]
    %v191 = vld [vmem:[#allocation5 + $0x190] sm:$0xff]
    %v192 = vld [vmem:[#allocation5 + $0x198] sm:$0xff]
    %v193 = vld [vmem:[#allocation5 + $0x1a0] sm:$0xff]
    %v194 = vld [vmem:[#allocation5 + $0x1a8] sm:$0xff]
    %v195 = vld [vmem:[#allocation5 + $0x1b0] sm:$0xff]
    %v196 = vld [vmem:[#allocation5 + $0x1b8] sm:$0xff]
    %v197 = vld [vmem:[#allocation5 + $0x1c0] sm:$0xff]
    %v198 = vld [vmem:[#allocation5 + $0x1c8] sm:$0xff]
    %v199 = vld [vmem:[#allocation5 + $0x1d0] sm:$0xff]
    %v200 = vld [vmem:[#allocation5 + $0x1d8] sm:$0xff]
    %v201 = vld [vmem:[#allocation5 + $0x1e0] sm:$0xff]
    %v202 = vld [vmem:[#allocation5 + $0x1e8] sm:$0xff]
    %v203 = vld [vmem:[#allocation5 + $0x1f0] sm:$0xff]
    %v204 = vld [vmem:[#allocation5 + $0x1f8] sm:$0xff]
    %205 = vmatpush.msra.mxu0 %v201
    %206 = vmatpush.msra.mxu0 %v197
    %207 = vmatpush.msra.mxu0 %v193
    %208 = vmatpush.msra.mxu0 %v189
    %209 = vmatpush.msra.mxu0 %v185
    %210 = vmatpush.msra.mxu0 %v181
    %211 = vmatpush.msra.mxu0 %v177
    %212 = vmatpush.msra.mxu0 %v173
    %213 = vmatpush.msra.mxu0 %v169
    %214 = vmatpush.msra.mxu0 %v165
    %215 = vmatpush.msra.mxu0 %v161
    %216 = vmatpush.msra.mxu0 %v157
    %217 = vmatpush.msra.mxu0 %v153
    %218 = vmatpush.msra.mxu0 %v149
    %219 = vmatpush.msra.mxu0 %v145
    %220 = vmatpush.msra.mxu0 %v141
    %221 = vmatmul.f32.gmra.mxu0 %v125
    %v222 = vpop.f32.mrf.mxu0
    %v223 = vadd.f32 0.0, %v222
    %224 = vmatmul.f32.gmra.mxu0 %v126
    %v225 = vpop.f32.mrf.mxu0
    %v226 = vadd.f32 0.0, %v225
    %227 = vmatmul.f32.gmra.mxu0 %v127
    %v228 = vpop.f32.mrf.mxu0
    %v229 = vadd.f32 0.0, %v228
    %230 = vmatmul.f32.gmra.mxu0 %v128
    %v231 = vpop.f32.mrf.mxu0
    %v232 = vadd.f32 0.0, %v231
    %233 = vmatmul.f32.gmra.mxu0 %v129
    %v234 = vpop.f32.mrf.mxu0
    %v235 = vadd.f32 0.0, %v234
    %236 = vmatmul.f32.gmra.mxu0 %v130
    %v237 = vpop.f32.mrf.mxu0
    %v238 = vadd.f32 0.0, %v237
    %239 = vmatmul.f32.gmra.mxu0 %v131
    %v240 = vpop.f32.mrf.mxu0
    %v241 = vadd.f32 0.0, %v240
    %242 = vmatmul.f32.gmra.mxu0 %v132
    %v243 = vpop.f32.mrf.mxu0
    %v244 = vadd.f32 0.0, %v243
    %245 = vmatmul.f32.gmra.mxu0 %v133
    %v246 = vpop.f32.mrf.mxu0
    %v247 = vadd.f32 0.0, %v246
    %248 = vmatmul.f32.gmra.mxu0 %v134
    %v249 = vpop.f32.mrf.mxu0
    %v250 = vadd.f32 0.0, %v249
    %251 = vmatmul.f32.gmra.mxu0 %v135
    %v252 = vpop.f32.mrf.mxu0
    %v253 = vadd.f32 0.0, %v252
    %254 = vmatmul.f32.gmra.mxu0 %v136
    %v255 = vpop.f32.mrf.mxu0
    %v256 = vadd.f32 0.0, %v255
    %257 = vmatmul.f32.gmra.mxu0 %v137
    %v258 = vpop.f32.mrf.mxu0
    %v259 = vadd.f32 0.0, %v258
    %260 = vmatmul.f32.gmra.mxu0 %v138
    %v261 = vpop.f32.mrf.mxu0
    %v262 = vadd.f32 0.0, %v261
    %263 = vmatmul.f32.gmra.mxu0 %v139
    %v264 = vpop.f32.mrf.mxu0
    %v265 = vadd.f32 0.0, %v264
    %266 = vmatmul.f32.gmra.mxu0 %v140
    %v267 = vpop.f32.mrf.mxu0
    %v268 = vadd.f32 0.0, %v267
    %269 = vdwg.mxu0
    %270 = vmatpush.msra.mxu0 %v202
    %271 = vmatpush.msra.mxu0 %v198
    %272 = vmatpush.msra.mxu0 %v194
    %273 = vmatpush.msra.mxu0 %v190
    %274 = vmatpush.msra.mxu0 %v186
    %275 = vmatpush.msra.mxu0 %v182
    %276 = vmatpush.msra.mxu0 %v178
    %277 = vmatpush.msra.mxu0 %v174
    %278 = vmatpush.msra.mxu0 %v170
    %279 = vmatpush.msra.mxu0 %v166
    %280 = vmatpush.msra.mxu0 %v162
    %281 = vmatpush.msra.mxu0 %v158
    %282 = vmatpush.msra.mxu0 %v154
    %283 = vmatpush.msra.mxu0 %v150
    %284 = vmatpush.msra.mxu0 %v146
    %285 = vmatpush.msra.mxu0 %v142
    %286 = vmatmul.f32.gmra.mxu0 %v125
    %v287 = vpop.f32.mrf.mxu0
    %v288 = vadd.f32 0.0, %v287
    %289 = vmatmul.f32.gmra.mxu0 %v126
    %v290 = vpop.f32.mrf.mxu0
    %v291 = vadd.f32 0.0, %v290
    %292 = vmatmul.f32.gmra.mxu0 %v127
    %v293 = vpop.f32.mrf.mxu0
    %v294 = vadd.f32 0.0, %v293
    %295 = vmatmul.f32.gmra.mxu0 %v128
    %v296 = vpop.f32.mrf.mxu0
    %v297 = vadd.f32 0.0, %v296
    %298 = vmatmul.f32.gmra.mxu0 %v129
    %v299 = vpop.f32.mrf.mxu0
    %v300 = vadd.f32 0.0, %v299
    %301 = vmatmul.f32.gmra.mxu0 %v130
    %v302 = vpop.f32.mrf.mxu0
    %v303 = vadd.f32 0.0, %v302
    %304 = vmatmul.f32.gmra.mxu0 %v131
    %v305 = vpop.f32.mrf.mxu0
    %v306 = vadd.f32 0.0, %v305
    %307 = vmatmul.f32.gmra.mxu0 %v132
    %v308 = vpop.f32.mrf.mxu0
    %v309 = vadd.f32 0.0, %v308
    %310 = vmatmul.f32.gmra.mxu0 %v133
    %v311 = vpop.f32.mrf.mxu0
    %v312 = vadd.f32 0.0, %v311
    %313 = vmatmul.f32.gmra.mxu0 %v134
    %v314 = vpop.f32.mrf.mxu0
    %v315 = vadd.f32 0.0, %v314
    %316 = vmatmul.f32.gmra.mxu0 %v135
    %v317 = vpop.f32.mrf.mxu0
    %v318 = vadd.f32 0.0, %v317
    %319 = vmatmul.f32.gmra.mxu0 %v136
    %v320 = vpop.f32.mrf.mxu0
    %v321 = vadd.f32 0.0, %v320
    %322 = vmatmul.f32.gmra.mxu0 %v137
    %v323 = vpop.f32.mrf.mxu0
    %v324 = vadd.f32 0.0, %v323
    %325 = vmatmul.f32.gmra.mxu0 %v138
    %v326 = vpop.f32.mrf.mxu0
    %v327 = vadd.f32 0.0, %v326
    %328 = vmatmul.f32.gmra.mxu0 %v139
    %v329 = vpop.f32.mrf.mxu0
    %v330 = vadd.f32 0.0, %v329
    %331 = vmatmul.f32.gmra.mxu0 %v140
    %v332 = vpop.f32.mrf.mxu0
    %v333 = vadd.f32 0.0, %v332
    %334 = vdwg.mxu0
    %335 = vmatpush.msra.mxu0 %v203
    %336 = vmatpush.msra.mxu0 %v199
    %337 = vmatpush.msra.mxu0 %v195
    %338 = vmatpush.msra.mxu0 %v191
    %339 = vmatpush.msra.mxu0 %v187
    %340 = vmatpush.msra.mxu0 %v183
    %341 = vmatpush.msra.mxu0 %v179
    %342 = vmatpush.msra.mxu0 %v175
    %343 = vmatpush.msra.mxu0 %v171
    %344 = vmatpush.msra.mxu0 %v167
    %345 = vmatpush.msra.mxu0 %v163
    %346 = vmatpush.msra.mxu0 %v159
    %347 = vmatpush.msra.mxu0 %v155
    %348 = vmatpush.msra.mxu0 %v151
    %349 = vmatpush.msra.mxu0 %v147
    %350 = vmatpush.msra.mxu0 %v143
    %351 = vmatmul.f32.gmra.mxu0 %v125
    %v352 = vpop.f32.mrf.mxu0
    %v353 = vadd.f32 0.0, %v352
    %354 = vmatmul.f32.gmra.mxu0 %v126
    %v355 = vpop.f32.mrf.mxu0
    %v356 = vadd.f32 0.0, %v355
    %357 = vmatmul.f32.gmra.mxu0 %v127
    %v358 = vpop.f32.mrf.mxu0
    %v359 = vadd.f32 0.0, %v358
    %360 = vmatmul.f32.gmra.mxu0 %v128
    %v361 = vpop.f32.mrf.mxu0
    %v362 = vadd.f32 0.0, %v361
    %363 = vmatmul.f32.gmra.mxu0 %v129
    %v364 = vpop.f32.mrf.mxu0
    %v365 = vadd.f32 0.0, %v364
    %366 = vmatmul.f32.gmra.mxu0 %v130
    %v367 = vpop.f32.mrf.mxu0
    %v368 = vadd.f32 0.0, %v367
    %369 = vmatmul.f32.gmra.mxu0 %v131
    %v370 = vpop.f32.mrf.mxu0
    %v371 = vadd.f32 0.0, %v370
    %372 = vmatmul.f32.gmra.mxu0 %v132
    %v373 = vpop.f32.mrf.mxu0
    %v374 = vadd.f32 0.0, %v373
    %375 = vmatmul.f32.gmra.mxu0 %v133
    %v376 = vpop.f32.mrf.mxu0
    %v377 = vadd.f32 0.0, %v376
    %378 = vmatmul.f32.gmra.mxu0 %v134
    %v379 = vpop.f32.mrf.mxu0
    %v380 = vadd.f32 0.0, %v379
    %381 = vmatmul.f32.gmra.mxu0 %v135
    %v382 = vpop.f32.mrf.mxu0
    %v383 = vadd.f32 0.0, %v382
    %384 = vmatmul.f32.gmra.mxu0 %v136
    %v385 = vpop.f32.mrf.mxu0
    %v386 = vadd.f32 0.0, %v385
    %387 = vmatmul.f32.gmra.mxu0 %v137
    %v388 = vpop.f32.mrf.mxu0
    %v389 = vadd.f32 0.0, %v388
    %390 = vmatmul.f32.gmra.mxu0 %v138
    %v391 = vpop.f32.mrf.mxu0
    %v392 = vadd.f32 0.0, %v391
    %393 = vmatmul.f32.gmra.mxu0 %v139
    %v394 = vpop.f32.mrf.mxu0
    %v395 = vadd.f32 0.0, %v394
    %396 = vmatmul.f32.gmra.mxu0 %v140
    %v397 = vpop.f32.mrf.mxu0
    %v398 = vadd.f32 0.0, %v397
    %399 = vdwg.mxu0
    %400 = vmatpush.msra.mxu0 %v204
    %401 = vmatpush.msra.mxu0 %v200
    %402 = vmatpush.msra.mxu0 %v196
    %403 = vmatpush.msra.mxu0 %v192
    %404 = vmatpush.msra.mxu0 %v188
    %405 = vmatpush.msra.mxu0 %v184
    %406 = vmatpush.msra.mxu0 %v180
    %407 = vmatpush.msra.mxu0 %v176
    %408 = vmatpush.msra.mxu0 %v172
    %409 = vmatpush.msra.mxu0 %v168
    %410 = vmatpush.msra.mxu0 %v164
    %411 = vmatpush.msra.mxu0 %v160
    %412 = vmatpush.msra.mxu0 %v156
    %413 = vmatpush.msra.mxu0 %v152
    %414 = vmatpush.msra.mxu0 %v148
    %415 = vmatpush.msra.mxu0 %v144
    %416 = vmatmul.f32.gmra.mxu0 %v125
    %v417 = vpop.f32.mrf.mxu0
    %v418 = vadd.f32 0.0, %v417
    %419 = vmatmul.f32.gmra.mxu0 %v126
    %v420 = vpop.f32.mrf.mxu0
    %v421 = vadd.f32 0.0, %v420
    %422 = vmatmul.f32.gmra.mxu0 %v127
    %v423 = vpop.f32.mrf.mxu0
    %v424 = vadd.f32 0.0, %v423
    %425 = vmatmul.f32.gmra.mxu0 %v128
    %v426 = vpop.f32.mrf.mxu0
    %v427 = vadd.f32 0.0, %v426
    %428 = vmatmul.f32.gmra.mxu0 %v129
    %v429 = vpop.f32.mrf.mxu0
    %v430 = vadd.f32 0.0, %v429
    %431 = vmatmul.f32.gmra.mxu0 %v130
    %v432 = vpop.f32.mrf.mxu0
    %v433 = vadd.f32 0.0, %v432
    %434 = vmatmul.f32.gmra.mxu0 %v131
    %v435 = vpop.f32.mrf.mxu0
    %v436 = vadd.f32 0.0, %v435
    %437 = vmatmul.f32.gmra.mxu0 %v132
    %v438 = vpop.f32.mrf.mxu0
    %v439 = vadd.f32 0.0, %v438
    %440 = vmatmul.f32.gmra.mxu0 %v133
    %v441 = vpop.f32.mrf.mxu0
    %v442 = vadd.f32 0.0, %v441
    %443 = vmatmul.f32.gmra.mxu0 %v134
    %v444 = vpop.f32.mrf.mxu0
    %v445 = vadd.f32 0.0, %v444
    %446 = vmatmul.f32.gmra.mxu0 %v135
    %v447 = vpop.f32.mrf.mxu0
    %v448 = vadd.f32 0.0, %v447
    %449 = vmatmul.f32.gmra.mxu0 %v136
    %v450 = vpop.f32.mrf.mxu0
    %v451 = vadd.f32 0.0, %v450
    %452 = vmatmul.f32.gmra.mxu0 %v137
    %v453 = vpop.f32.mrf.mxu0
    %v454 = vadd.f32 0.0, %v453
    %455 = vmatmul.f32.gmra.mxu0 %v138
    %v456 = vpop.f32.mrf.mxu0
    %v457 = vadd.f32 0.0, %v456
    %458 = vmatmul.f32.gmra.mxu0 %v139
    %v459 = vpop.f32.mrf.mxu0
    %v460 = vadd.f32 0.0, %v459
    %461 = vmatmul.f32.gmra.mxu0 %v140
    %v462 = vpop.f32.mrf.mxu0
    %v463 = vadd.f32 0.0, %v462
    %464 = vdwg.mxu0
    %v465 = vmax.f32 %v223, 0.0
    %v466 = vmax.f32 %v288, 0.0
    %v467 = vmax.f32 %v353, 0.0
    %v468 = vmax.f32 %v418, 0.0
    %v469 = vmax.f32 %v226, 0.0
    %v470 = vmax.f32 %v291, 0.0
    %v471 = vmax.f32 %v356, 0.0
    %v472 = vmax.f32 %v421, 0.0
    %v473 = vmax.f32 %v229, 0.0
    %v474 = vmax.f32 %v294, 0.0
    %v475 = vmax.f32 %v359, 0.0
    %v476 = vmax.f32 %v424, 0.0
    %v477 = vmax.f32 %v232, 0.0
    %v478 = vmax.f32 %v297, 0.0
    %v479 = vmax.f32 %v362, 0.0
    %v480 = vmax.f32 %v427, 0.0
    %v481 = vmax.f32 %v235, 0.0
    %v482 = vmax.f32 %v300, 0.0
    %v483 = vmax.f32 %v365, 0.0
    %v484 = vmax.f32 %v430, 0.0
    %v485 = vmax.f32 %v238, 0.0
    %v486 = vmax.f32 %v303, 0.0
    %v487 = vmax.f32 %v368, 0.0
    %v488 = vmax.f32 %v433, 0.0
    %v489 = vmax.f32 %v241, 0.0
    %v490 = vmax.f32 %v306, 0.0
    %v491 = vmax.f32 %v371, 0.0
    %v492 = vmax.f32 %v436, 0.0
    %v493 = vmax.f32 %v244, 0.0
    %v494 = vmax.f32 %v309, 0.0
    %v495 = vmax.f32 %v374, 0.0
    %v496 = vmax.f32 %v439, 0.0
    %v497 = vmax.f32 %v247, 0.0
    %v498 = vmax.f32 %v312, 0.0
    %v499 = vmax.f32 %v377, 0.0
    %v500 = vmax.f32 %v442, 0.0
    %v501 = vmax.f32 %v250, 0.0
    %v502 = vmax.f32 %v315, 0.0
    %v503 = vmax.f32 %v380, 0.0
    %v504 = vmax.f32 %v445, 0.0
    %v505 = vmax.f32 %v253, 0.0
    %v506 = vmax.f32 %v318, 0.0
    %v507 = vmax.f32 %v383, 0.0
    %v508 = vmax.f32 %v448, 0.0
    %v509 = vmax.f32 %v256, 0.0
    %v510 = vmax.f32 %v321, 0.0
    %v511 = vmax.f32 %v386, 0.0
    %v512 = vmax.f32 %v451, 0.0
    %v513 = vmax.f32 %v259, 0.0
    %v514 = vmax.f32 %v324, 0.0
    %v515 = vmax.f32 %v389, 0.0
    %v516 = vmax.f32 %v454, 0.0
    %v517 = vmax.f32 %v262, 0.0
    %v518 = vmax.f32 %v327, 0.0
    %v519 = vmax.f32 %v392, 0.0
    %v520 = vmax.f32 %v457, 0.0
    %v521 = vmax.f32 %v265, 0.0
    %v522 = vmax.f32 %v330, 0.0
    %v523 = vmax.f32 %v395, 0.0
    %v524 = vmax.f32 %v460, 0.0
    %v525 = vmax.f32 %v268, 0.0
    %v526 = vmax.f32 %v333, 0.0
    %v527 = vmax.f32 %v398, 0.0
    %v528 = vmax.f32 %v463, 0.0
    %529 = vst [vmem:[#allocation7] sm:$0xff] %v465
    %530 = vst [vmem:[#allocation7 + $0x8] sm:$0xff] %v466
    %531 = vst [vmem:[#allocation7 + $0x10] sm:$0xff] %v467
    %532 = vst [vmem:[#allocation7 + $0x18] sm:$0xff] %v468
    %533 = vst [vmem:[#allocation7 + $0x20] sm:$0xff] %v469
    %534 = vst [vmem:[#allocation7 + $0x28] sm:$0xff] %v470
    %535 = vst [vmem:[#allocation7 + $0x30] sm:$0xff] %v471
    %536 = vst [vmem:[#allocation7 + $0x38] sm:$0xff] %v472
    %537 = vst [vmem:[#allocation7 + $0x40] sm:$0xff] %v473
    %538 = vst [vmem:[#allocation7 + $0x48] sm:$0xff] %v474
    %539 = vst [vmem:[#allocation7 + $0x50] sm:$0xff] %v475
    %540 = vst [vmem:[#allocation7 + $0x58] sm:$0xff] %v476
    %541 = vst [vmem:[#allocation7 + $0x60] sm:$0xff] %v477
    %542 = vst [vmem:[#allocation7 + $0x68] sm:$0xff] %v478
    %543 = vst [vmem:[#allocation7 + $0x70] sm:$0xff] %v479
    %544 = vst [vmem:[#allocation7 + $0x78] sm:$0xff] %v480
    %545 = vst [vmem:[#allocation7 + $0x80] sm:$0xff] %v481
    %546 = vst [vmem:[#allocation7 + $0x88] sm:$0xff] %v482
    %547 = vst [vmem:[#allocation7 + $0x90] sm:$0xff] %v483
    %548 = vst [vmem:[#allocation7 + $0x98] sm:$0xff] %v484
    %549 = vst [vmem:[#allocation7 + $0xa0] sm:$0xff] %v485
    %550 = vst [vmem:[#allocation7 + $0xa8] sm:$0xff] %v486
    %551 = vst [vmem:[#allocation7 + $0xb0] sm:$0xff] %v487
    %552 = vst [vmem:[#allocation7 + $0xb8] sm:$0xff] %v488
    %553 = vst [vmem:[#allocation7 + $0xc0] sm:$0xff] %v489
    %554 = vst [vmem:[#allocation7 + $0xc8] sm:$0xff] %v490
    %555 = vst [vmem:[#allocation7 + $0xd0] sm:$0xff] %v491
    %556 = vst [vmem:[#allocation7 + $0xd8] sm:$0xff] %v492
    %557 = vst [vmem:[#allocation7 + $0xe0] sm:$0xff] %v493
    %558 = vst [vmem:[#allocation7 + $0xe8] sm:$0xff] %v494
    %559 = vst [vmem:[#allocation7 + $0xf0] sm:$0xff] %v495
    %560 = vst [vmem:[#allocation7 + $0xf8] sm:$0xff] %v496
    %561 = vst [vmem:[#allocation7 + $0x100] sm:$0xff] %v497
    %562 = vst [vmem:[#allocation7 + $0x108] sm:$0xff] %v498
    %563 = vst [vmem:[#allocation7 + $0x110] sm:$0xff] %v499
    %564 = vst [vmem:[#allocation7 + $0x118] sm:$0xff] %v500
    %565 = vst [vmem:[#allocation7 + $0x120] sm:$0xff] %v501
    %566 = vst [vmem:[#allocation7 + $0x128] sm:$0xff] %v502
    %567 = vst [vmem:[#allocation7 + $0x130] sm:$0xff] %v503
    %568 = vst [vmem:[#allocation7 + $0x138] sm:$0xff] %v504
    %569 = vst [vmem:[#allocation7 + $0x140] sm:$0xff] %v505
    %570 = vst [vmem:[#allocation7 + $0x148] sm:$0xff] %v506
    %571 = vst [vmem:[#allocation7 + $0x150] sm:$0xff] %v507
    %572 = vst [vmem:[#allocation7 + $0x158] sm:$0xff] %v508
    %573 = vst [vmem:[#allocation7 + $0x160] sm:$0xff] %v509
    %574 = vst [vmem:[#allocation7 + $0x168] sm:$0xff] %v510
    %575 = vst [vmem:[#allocation7 + $0x170] sm:$0xff] %v511
    %576 = vst [vmem:[#allocation7 + $0x178] sm:$0xff] %v512
    %577 = vst [vmem:[#allocation7 + $0x180] sm:$0xff] %v513
    %578 = vst [vmem:[#allocation7 + $0x188] sm:$0xff] %v514
    %579 = vst [vmem:[#allocation7 + $0x190] sm:$0xff] %v515
    %580 = vst [vmem:[#allocation7 + $0x198] sm:$0xff] %v516
    %581 = vst [vmem:[#allocation7 + $0x1a0] sm:$0xff] %v517
    %582 = vst [vmem:[#allocation7 + $0x1a8] sm:$0xff] %v518
    %583 = vst [vmem:[#allocation7 + $0x1b0] sm:$0xff] %v519
    %584 = vst [vmem:[#allocation7 + $0x1b8] sm:$0xff] %v520
    %585 = vst [vmem:[#allocation7 + $0x1c0] sm:$0xff] %v521
    %586 = vst [vmem:[#allocation7 + $0x1c8] sm:$0xff] %v522
    %587 = vst [vmem:[#allocation7 + $0x1d0] sm:$0xff] %v523
    %588 = vst [vmem:[#allocation7 + $0x1d8] sm:$0xff] %v524
    %589 = vst [vmem:[#allocation7 + $0x1e0] sm:$0xff] %v525
    %590 = vst [vmem:[#allocation7 + $0x1e8] sm:$0xff] %v526
    %591 = vst [vmem:[#allocation7 + $0x1f0] sm:$0xff] %v527
    %592 = vst [vmem:[#allocation7 + $0x1f8] sm:$0xff] %v528
    // Predicated region
    $region18: #{tpu_custom_call.1} parent=1 // pred_check
      _
    $region19: #{tpu_custom_call.1} parent=1 // pred_check_branch
      %594 = sbr.rel (0) target = $region21
    $region20: #{tpu_custom_call.1} parent=1 // pred_region
      %596 = vsyncadd [#allocation4], 0
      %s597 = sshll.u32 [#allocation7], 4
      %s598 = int_to_ptr.vmem [resolvable:$true] %s597
      %s599 = sshll.u32 %s2, 4
      %s600 = int_to_ptr.hbm [resolvable:$true] %s599
      %605 = dma.vmem_to_hbm [thread:$0]  %s598, 8192, %s600, [#allocation4], 512, 512, 32
    $region21: #{tpu_custom_call.1} parent=1 // pred_fallthru
      _
    // Predicated region
    $region22: #{tpu_custom_call.1} parent=1 // pred_check
      _
    $region23: #{tpu_custom_call.1} parent=1 // pred_check_branch
      %607 = sbr.rel (0) target = $region25
    $region24: #{tpu_custom_call.1} parent=1 // pred_region
      %609 = dma.done [#allocation4], 8192
    $region25: #{tpu_custom_call.1} parent=1 // pred_fallthru
      _
    %610 = vsyncpa [#allocation3], 1
    %611 = vsyncpa [#allocation6], 1
    %612 = vsyncpa [#allocation4], 1

</llo_original>
